<compile_context>
chip_gen: v7x
topology: tpu7x:2x2x1
jax: 0.10.0
libtpu: 0.0.40
codegen_flags: <defaults>
</compile_context>

<pallas_src>
import functools
import math

import jax
import jax.numpy as jnp
from jax.experimental import pallas as pl
from jax.experimental.pallas import tpu as pltpu

_MAX_ROW_TILE = 1024     # rows per grid step (per review: 1024-2048)
_MIN_SPLIT_ROWS = 32     # below this, don't force 2 grid steps


def _round_up(x, m):
    return ((x + m - 1) // m) * m


def _cdiv(a, b):
    return -(-a // b)


@functools.lru_cache(maxsize=None)
def _vmem_limit_bytes():
    """Generation-aware scoped-VMEM cap (≈48 MiB on v7x, ≈96 MiB on v5e/v6e)."""
    cap = None
    try:
        cap = getattr(pltpu.get_tpu_info(), "vmem_capacity_bytes", None)
    except Exception:
        cap = None
    if not cap:
        cap = 64 * 1024 * 1024           # conservative (v7x per-core VMEM)
    return int(min(96 * 1024 * 1024, (cap * 3) // 4))


def _row_tiling(rows, max_tile=_MAX_ROW_TILE):
    """Pick a row tile that (a) is a multiple of 16 (bf16 sublane packing),
    (b) keeps pad waste low, and (c) yields >= 2 grid steps when there is
    enough work, so both v7x TensorCores get a share of the parallel axis."""
    min_tiles = 2 if rows >= _MIN_SPLIT_ROWS else 1
    n_target = max(min_tiles, _cdiv(rows, max_tile))
    ts = _round_up(_cdiv(rows, n_target), 16)
    ts = min(ts, _round_up(rows, 8))     # don't over-pad tiny inputs
    n_tiles = _cdiv(rows, ts)
    return ts, n_tiles, n_tiles * ts


# ----------------------------------------------------------------------------
# Activations
# ----------------------------------------------------------------------------
def _activation_kernel(x, name):
    # f32 elementwise. SiLU's divide and the tanh-GELU go to the EUP (their
    # own VLIW slot); an erf-GELU would burn VPU cycles instead.
    if name == "Tanh":
        return jnp.tanh(x)
    if name == "GELU":
        return 0.5 * x * (1.0 + jnp.tanh(0.7978845608028654 *
                                         (x + 0.044715 * x * x * x)))
    if name == "SiLU":
        # approx reciprocal (EUP vrcp), ~2^-12 rel. error -> inside tolerance.
        return x * pl.reciprocal(1.0 + jnp.exp(-x), approx=True)
    raise ValueError(f"unknown activation {name}")


def _activation_ref(x, name):
    if name == "Tanh":
        return jnp.tanh(x)
    if name == "GELU":
        return 0.5 * x * (1.0 + jnp.tanh(0.7978845608028654 *
                                         (x + 0.044715 * x * x * x)))
    if name == "SiLU":
        return x * (1.0 / (1.0 + jnp.exp(-x)))
    raise ValueError(f"unknown activation {name}")


# ----------------------------------------------------------------------------
# Pallas kernels
# ----------------------------------------------------------------------------
def _linear_kernel(x_ref, w_ref, b_ref, o_ref):
    # LinearModel.forward: y = x @ W^T + b (W pre-transposed to (Fin, Fout));
    # bf16 MXU matmul, f32 accumulation + bias.
    y = jnp.dot(x_ref[...], w_ref[...], preferred_element_type=jnp.float32)
    o_ref[...] = (y + b_ref[...]).astype(o_ref.dtype)


def _nonlinear_kernel(activation_fn, n_nn_layers, n_components, *refs):
    """NonLinearModel forward.  Grid = (sample_tiles,): every grid step
    processes ALL 2*lambda+1 components of one sample-row tile.

    refs: inv, eq, [w_nn_i, b_nn_i]*n, w_in_big, b_in_big, w_out_big,
          b_out_big, out
      inv : (TS, Finv)    bf16
      eq  : (TS, C*Fin)   bf16  -- native sample-major layout, components
                                   packed along lanes (no host transpose)
      w_in_big / w_out_big : bf16 block-diagonal (C*Fin, C*H) / (C*H, C*Fout)
      out : (TS, C*Fout)  f32   -- packed lanes, no 8x write amplification
    """
    inv_ref, eq_ref = refs[0], refs[1]
    nn_refs = refs[2:2 + 2 * n_nn_layers]
    (w_in_ref, b_in_ref, w_out_ref, b_out_ref,
     out_ref) = refs[2 + 2 * n_nn_layers:]

    # Invariant NN: computed ONCE per sample tile, shared by all components.
    h = inv_ref[...]                                               # bf16
    for li in range(n_nn_layers):
        if li > 0:
            h = _activation_kernel(h, activation_fn).astype(jnp.bfloat16)
        h = jnp.dot(h, nn_refs[2 * li][...],
                    preferred_element_type=jnp.float32) + nn_refs[2 * li + 1][...]

    # Equivariant input layer for ALL components in one MXU call (block-diag
    # weights); elementwise mix in f32 (safe on v5e, which has no bf16 VALU).
    # TODO(synk): on v6e/v7x the mix could run in bf16 to trim VPU work.
    lin = jnp.dot(eq_ref[...], w_in_ref[...],
                  preferred_element_type=jnp.float32) + b_in_ref[...]   # (TS, C*H)
    h_tiled = jnp.concatenate([h] * n_components, axis=1)               # (TS, C*H)
    mixed = (lin * h_tiled).astype(jnp.bfloat16)
    out = jnp.dot(mixed, w_out_ref[...],
                  preferred_element_type=jnp.float32) + b_out_ref[...]  # (TS, C*Fout)
    out_ref[...] = out.astype(out_ref.dtype)


# ----------------------------------------------------------------------------
# BlockSpec helpers
# ----------------------------------------------------------------------------
def _full_spec(a):
    # Resident array: same (all-zero) block index at every grid step.
    # TODO(synk): pipeline_mode=pl.Buffered(1) would drop the redundant second
    # buffer for these constant blocks; kept at the default for portability.
    return pl.BlockSpec(a.shape, lambda *_, n=a.ndim: (0,) * n)


# ----------------------------------------------------------------------------
# Wrappers
# ----------------------------------------------------------------------------
def linear_forward_pallas(prep, eq):
    """LinearModel on equivariant values (S, C, Fin) -> (S, C, Fout)."""
    S, C, Fin = eq.shape
    w, b = prep["linear"]                  # w: bf16 (Fin, Fout), b: f32 (1, Fout)
    Fout = prep["out_features"]

    N = S * C
    TM, n_tiles, N_pad = _row_tiling(N)

    x2d = eq.reshape(N, Fin).astype(jnp.bfloat16)    # contiguous reshape: free
    if N_pad != N:
        x2d = jnp.pad(x2d, ((0, N_pad - N), (0, 0)))

    cost = pl.CostEstimate(
        flops=2 * N_pad * Fin * Fout,
        transcendentals=0,
        bytes_accessed=(N_pad * Fin * 2 + Fin * Fout * 2 + Fout * 4
                        + N_pad * Fout * 4))

    out = pl.pallas_call(
        _linear_kernel,
        out_shape=jax.ShapeDtypeStruct((N_pad, Fout), jnp.float32),
        grid=(n_tiles,),
        in_specs=[pl.BlockSpec((TM, Fin), lambda i: (i, 0)),
                  _full_spec(w), _full_spec(b)],
        out_specs=pl.BlockSpec((TM, Fout), lambda i: (i, 0)),
        compiler_params=pltpu.CompilerParams(
            dimension_semantics=("parallel",),
            vmem_limit_bytes=_vmem_limit_bytes()),
        cost_estimate=cost,
    )(x2d, w, b)
    if N_pad != N:
        out = out[:N]
    return out.reshape(S, C, Fout)


def nonlinear_forward_pallas(prep, eq, inv):
    """NonLinearModel: eq (S, C, Fin), inv (S, 1, Finv) -> (S, C, Fout)."""
    S, C, Fin = eq.shape
    assert inv.shape[0] == S and inv.shape[1] == 1
    assert C >= 1 and C % 2 == 1          # (2*lambda + 1)
    assert C == prep["n_components"], "prep built for a different lambda channel"
    Finv = inv.shape[-1]
    Fout = prep["out_features"]
    H = prep["hidden_width"]

    TS, n_tiles, S_pad = _row_tiling(S)

    # Native sample-major layout: (S, C, Fin) -> (S, C*Fin) is a contiguous
    # (free) reshape -- no host-side transpose pass, no C-replicated invariant.
    eq2d = eq.reshape(S, C * Fin).astype(jnp.bfloat16)
    inv2d = inv[:, 0, :].astype(jnp.bfloat16)
    if S_pad != S:
        # Zero tail rows flow through the NN (bias-only rows) and are sliced
        # off below -- wasted work only, no numerical hazard.
        eq2d = jnp.pad(eq2d, ((0, S_pad - S), (0, 0)))
        inv2d = jnp.pad(inv2d, ((0, S_pad - S), (0, 0)))

    nn_flat = prep["invariant_nn_flat"]          # [w1, b1, w2, b2, ...]
    w_in, b_in = prep["input_layer_big"]         # (C*Fin, C*H), (1, C*H)
    w_out, b_out = prep["output_layer_big"]      # (C*H, C*Fout), (1, C*Fout)
    n_nn = len(nn_flat) // 2
    weights = list(nn_flat) + [w_in, b_in, w_out, b_out]
    kernel = functools.partial(_nonlinear_kernel, prep["activation_fn"], n_nn, C)

    nn_flops = sum(2 * w.shape[0] * w.shape[1] for w in nn_flat[0::2])
    act_elems = sum(w.shape[0] for w in nn_flat[0::2][1:])
    cost = pl.CostEstimate(
        flops=S_pad * (nn_flops + 2 * (C * Fin) * (C * H)
                       + 2 * (C * H) * (C * Fout)),
        transcendentals=S_pad * act_elems,
        bytes_accessed=(S_pad * (Finv + C * Fin) * 2
                        + sum(int(a.size) * a.dtype.itemsize for a in weights)
                        + S_pad * C * Fout * 4))

    out = pl.pallas_call(
        kernel,
        out_shape=jax.ShapeDtypeStruct((S_pad, C * Fout), jnp.float32),
        grid=(n_tiles,),
        in_specs=[pl.BlockSpec((TS, Finv), lambda i: (i, 0)),       # invariant
                  pl.BlockSpec((TS, C * Fin), lambda i: (i, 0)),    # equivariant
                  ] + [_full_spec(a) for a in weights],
        out_specs=pl.BlockSpec((TS, C * Fout), lambda i: (i, 0)),
        compiler_params=pltpu.CompilerParams(
            dimension_semantics=("parallel",),
            vmem_limit_bytes=_vmem_limit_bytes()),
        cost_estimate=cost,
    )(inv2d, eq2d, *weights)

    if S_pad != S:
        out = out[:S]
    return out.reshape(S, C, Fout)        # contiguous reshape: free, no transpose


def equi_model_local_forward(prep, eq, inv=None):
    """EquiModelLocal.forward on the block's .values arrays."""
    if prep["model_type"] == "linear":
        return linear_forward_pallas(prep, eq)
    elif prep["model_type"] == "nonlinear":
        return nonlinear_forward_pallas(prep, eq, inv)
    else:
        raise ValueError("model_type must be 'linear' or 'nonlinear'")


# ----------------------------------------------------------------------------
# One-time parameter preparation (cast weights to bf16, reshape biases, build
# block-diagonal per-component input/output weights).  Done once at data-prep
# time, not per forward call.
# ----------------------------------------------------------------------------
def prepare_pallas_params(params, n_components=None):
    def prep_layer(w, b):
        return w.astype(jnp.bfloat16), b.reshape(1, -1).astype(jnp.float32)

    prep = {"model_type": params["model_type"]}
    if params["model_type"] == "linear":
        w, b = params["linear"]
        prep["out_features"] = int(w.shape[1])
        prep["linear"] = prep_layer(w, b)
        return prep

    assert n_components is not None and n_components % 2 == 1
    C = int(n_components)
    prep["n_components"] = C
    prep["activation_fn"] = params["activation_fn"]

    flat = []
    for w, b in params["invariant_nn"]:
        wb, bb = prep_layer(w, b)
        flat += [wb, bb]
    prep["invariant_nn_flat"] = flat

    def block_diag_big(w, b):
        eye = jnp.eye(C, dtype=w.dtype)
        w_big = jnp.kron(eye, w)                       # (C*K, C*N) block-diag
        b_big = jnp.tile(b.reshape(1, -1), (1, C))
        return w_big.astype(jnp.bfloat16), b_big.astype(jnp.float32)

    w_in, b_in = params["input_layer"]
    prep["hidden_width"] = int(w_in.shape[1])
    prep["input_layer_big"] = block_diag_big(w_in, b_in)
    w_out, b_out = params["output_layer"]
    prep["out_features"] = int(w_out.shape[1])
    prep["output_layer_big"] = block_diag_big(w_out, b_out)
    return prep


# ----------------------------------------------------------------------------
# Deterministic parameter init (torch.nn.Linear default: U(-1/sqrt(fan_in), .))
# Weights stored as (in_features, out_features) == torch weight transposed.
# ----------------------------------------------------------------------------
def _init_linear(key, fan_in, fan_out, bias):
    k = 1.0 / math.sqrt(fan_in)
    kw, kb = jax.random.split(key)
    w = jax.random.uniform(kw, (fan_in, fan_out), jnp.float32, minval=-k, maxval=k)
    if bias:
        b = jax.random.uniform(kb, (fan_out,), jnp.float32, minval=-k, maxval=k)
    else:
        b = jnp.zeros((fan_out,), jnp.float32)
    return w, b


def init_equi_model_local(key, model_type, in_features, out_features, bias,
                          in_invariant_features=None, hidden_layer_widths=None,
                          activation_fn=None):
    params = {"model_type": model_type}
    if model_type == "linear":
        params["linear"] = _init_linear(key, in_features, out_features, bias)
        return params
    # nonlinear
    assert in_invariant_features is not None
    assert hidden_layer_widths is not None and len(hidden_layer_widths) >= 1
    assert activation_fn in ("Tanh", "GELU", "SiLU")
    n_nn = len(hidden_layer_widths)
    keys = jax.random.split(key, 2 + n_nn)
    params["activation_fn"] = activation_fn
    params["input_layer"] = _init_linear(keys[0], in_features,
                                         hidden_layer_widths[-1], bias)
    nn_layers = [_init_linear(keys[1], in_invariant_features,
                              hidden_layer_widths[0], True)]
    for li in range(n_nn - 1):
        nn_layers.append(_init_linear(keys[2 + li], hidden_layer_widths[li],
                                      hidden_layer_widths[li + 1], True))
    params["invariant_nn"] = nn_layers
    params["output_layer"] = _init_linear(keys[-1], hidden_layer_widths[-1],
                                          out_features, bias)
    return params


# ----------------------------------------------------------------------------
# Pure-JAX references mirroring the kernel's precision strategy
# (bf16 matmul operands, f32 accumulation / elementwise) for verification.
# ----------------------------------------------------------------------------
def _b16(a):
    return a.astype(jnp.bfloat16)


def _linear_ref(params, eq):
    w, b = params["linear"]
    return jnp.dot(_b16(eq), _b16(w), preferred_element_type=jnp.float32) + b


def _nonlinear_ref(params, eq, inv):
    act = params["activation_fn"]
    h = _b16(inv[:, 0, :])                                  # (S, Finv)
    for li, (w, b) in enumerate(params["invariant_nn"]):
        if li > 0:
            h = _b16(_activation_ref(h, act))
        h = jnp.dot(h, _b16(w), preferred_element_type=jnp.float32) + b
    w_in, b_in = params["input_layer"]
    lin = jnp.dot(_b16(eq), _b16(w_in), preferred_element_type=jnp.float32) + b_in
    mixed = lin * h[:, None, :]                             # broadcast over C
    w_out, b_out = params["output_layer"]
    return jnp.dot(_b16(mixed), _b16(w_out),
                   preferred_element_type=jnp.float32) + b_out


# ----------------------------------------------------------------------------
if __name__ == "__main__":
    key = jax.random.PRNGKey(0)
    k_eq, k_inv, k_p1, k_p2 = jax.random.split(key, 4)

    # Small shapes consistent with equistore TensorBlock values:
    # samples=8, components=(2*lambda+1)=5, in_features=32,
    # invariant features=24, hidden=[32, 64], out_features=16.
    S, C, FIN, FINV, FOUT = 8, 5, 32, 24, 16
    HIDDEN = [32, 64]

    eq = jax.random.normal(k_eq, (S, C, FIN), jnp.float32)      # input.values
    inv = jax.random.normal(k_inv, (S, 1, FINV), jnp.float32)   # invariant.values

    # --- nonlinear EquiModelLocal ---
    p_nl = init_equi_model_local(
        k_p1, "nonlinear", FIN, FOUT, bias=True,
        in_invariant_features=FINV, hidden_layer_widths=HIDDEN,
        activation_fn="SiLU")
    prep_nl = prepare_pallas_params(p_nl, n_components=C)
    out_nl = equi_model_local_forward(prep_nl, eq, inv)
    jax.block_until_ready(out_nl)
    ref_nl = _nonlinear_ref(p_nl, eq, inv)
    assert out_nl.shape == (S, C, FOUT)
    assert jnp.allclose(out_nl, ref_nl, atol=2e-2, rtol=2e-2), "nonlinear mismatch"

    # --- linear EquiModelLocal ---
    p_lin = init_equi_model_local(k_p2, "linear", FIN, FOUT, bias=True)
    prep_lin = prepare_pallas_params(p_lin)
    out_lin = equi_model_local_forward(prep_lin, eq)
    jax.block_until_ready(out_lin)
    ref_lin = _linear_ref(p_lin, eq)
    assert out_lin.shape == (S, C, FOUT)
    assert jnp.allclose(out_lin, ref_lin, atol=2e-2, rtol=2e-2), "linear mismatch"

    print("KERNEL_OK")
</pallas_src>

<mosaic_0001>
module attributes {stable_mosaic.version = 11 : i64} {
  func.func @_nonlinear_kernel(%arg0: i32, %arg1: memref<8x24xbf16, #tpu.memory_space<vmem>>, %arg2: memref<8x160xbf16, #tpu.memory_space<vmem>>, %arg3: memref<24x32xbf16, #tpu.memory_space<vmem>>, %arg4: memref<1x32xf32, #tpu.memory_space<vmem>>, %arg5: memref<32x64xbf16, #tpu.memory_space<vmem>>, %arg6: memref<1x64xf32, #tpu.memory_space<vmem>>, %arg7: memref<160x320xbf16, #tpu.memory_space<vmem>>, %arg8: memref<1x320xf32, #tpu.memory_space<vmem>>, %arg9: memref<320x80xbf16, #tpu.memory_space<vmem>>, %arg10: memref<1x80xf32, #tpu.memory_space<vmem>>, %arg11: memref<8x80xf32, #tpu.memory_space<vmem>>) attributes {dimension_semantics = [#tpu.dimension_semantics<parallel>], iteration_bounds = array<i64: 1>, scalar_prefetch = 0 : i64, scratch_operands = 0 : i64, tpu.core_type = #tpu.core_type<tc>, window_params = [{transform_indices = @transform_0, window_bounds = array<i64: 8, 24>}, {transform_indices = @transform_1, window_bounds = array<i64: 8, 160>}, {pipeline_mode = #tpu.pipeline_mode<synchronous>, transform_indices = @transform_2, window_bounds = array<i64: 24, 32>}, {pipeline_mode = #tpu.pipeline_mode<synchronous>, transform_indices = @transform_3, window_bounds = array<i64: 1, 32>}, {pipeline_mode = #tpu.pipeline_mode<synchronous>, transform_indices = @transform_4, window_bounds = array<i64: 32, 64>}, {pipeline_mode = #tpu.pipeline_mode<synchronous>, transform_indices = @transform_5, window_bounds = array<i64: 1, 64>}, {pipeline_mode = #tpu.pipeline_mode<synchronous>, transform_indices = @transform_6, window_bounds = array<i64: 160, 320>}, {pipeline_mode = #tpu.pipeline_mode<synchronous>, transform_indices = @transform_7, window_bounds = array<i64: 1, 320>}, {pipeline_mode = #tpu.pipeline_mode<synchronous>, transform_indices = @transform_8, window_bounds = array<i64: 320, 80>}, {pipeline_mode = #tpu.pipeline_mode<synchronous>, transform_indices = @transform_9, window_bounds = array<i64: 1, 80>}, {transform_indices = @transform_10, window_bounds = array<i64: 8, 80>}]} {
    %c0 = arith.constant 0 : index
    %c0_0 = arith.constant 0 : index
    %0 = vector.load %arg1[%c0, %c0_0] : memref<8x24xbf16, #tpu.memory_space<vmem>>, vector<8x24xbf16>
    %c0_1 = arith.constant 0 : index
    %c0_2 = arith.constant 0 : index
    %1 = vector.load %arg3[%c0_1, %c0_2] : memref<24x32xbf16, #tpu.memory_space<vmem>>, vector<24x32xbf16>
    %cst = arith.constant dense<0.000000e+00> : vector<8x32xf32>
    %2 = tpu.matmul %0, %1, %cst {dimension_numbers = #tpu.dot_dimension_numbers<[1], [0], [0], [1], [0, 0, 1, 1], [], []>} : vector<8x24xbf16>, vector<24x32xbf16>, vector<8x32xf32> -> vector<8x32xf32>
    %c0_3 = arith.constant 0 : index
    %c0_4 = arith.constant 0 : index
    %3 = vector.load %arg4[%c0_3, %c0_4] : memref<1x32xf32, #tpu.memory_space<vmem>>, vector<1x32xf32>
    %4 = vector.broadcast %3 : vector<1x32xf32> to vector<8x32xf32>
    %5 = arith.addf %2, %4 : vector<8x32xf32>
    %cst_5 = arith.constant 0.000000e+00 : f32
    %6 = vector.broadcast %cst_5 : f32 to vector<8x32xf32>
    %7 = arith.subf %6, %5 : vector<8x32xf32>
    %8 = math.exp %7 : vector<8x32xf32>
    %cst_6 = arith.constant 1.000000e+00 : f32
    %9 = vector.broadcast %cst_6 : f32 to vector<8x32xf32>
    %10 = arith.addf %9, %8 : vector<8x32xf32>
    %11 = tpu.reciprocal %10 {approx = true} : vector<8x32xf32> -> vector<8x32xf32>
    %12 = arith.mulf %5, %11 : vector<8x32xf32>
    %13 = arith.truncf %12 : vector<8x32xf32> to vector<8x32xbf16>
    %c0_7 = arith.constant 0 : index
    %c0_8 = arith.constant 0 : index
    %14 = vector.load %arg5[%c0_7, %c0_8] : memref<32x64xbf16, #tpu.memory_space<vmem>>, vector<32x64xbf16>
    %cst_9 = arith.constant dense<0.000000e+00> : vector<8x64xf32>
    %15 = tpu.matmul %13, %14, %cst_9 {dimension_numbers = #tpu.dot_dimension_numbers<[1], [0], [0], [1], [0, 0, 1, 1], [], []>} : vector<8x32xbf16>, vector<32x64xbf16>, vector<8x64xf32> -> vector<8x64xf32>
    %c0_10 = arith.constant 0 : index
    %c0_11 = arith.constant 0 : index
    %16 = vector.load %arg6[%c0_10, %c0_11] : memref<1x64xf32, #tpu.memory_space<vmem>>, vector<1x64xf32>
    %17 = vector.broadcast %16 : vector<1x64xf32> to vector<8x64xf32>
    %18 = arith.addf %15, %17 : vector<8x64xf32>
    %c0_12 = arith.constant 0 : index
    %c0_13 = arith.constant 0 : index
    %19 = vector.load %arg2[%c0_12, %c0_13] : memref<8x160xbf16, #tpu.memory_space<vmem>>, vector<8x160xbf16>
    %c0_14 = arith.constant 0 : index
    %c0_15 = arith.constant 0 : index
    %20 = vector.load %arg7[%c0_14, %c0_15] : memref<160x320xbf16, #tpu.memory_space<vmem>>, vector<160x320xbf16>
    %cst_16 = arith.constant dense<0.000000e+00> : vector<8x320xf32>
    %21 = tpu.matmul %19, %20, %cst_16 {dimension_numbers = #tpu.dot_dimension_numbers<[1], [0], [0], [1], [0, 0, 1, 1], [], []>} : vector<8x160xbf16>, vector<160x320xbf16>, vector<8x320xf32> -> vector<8x320xf32>
    %c0_17 = arith.constant 0 : index
    %c0_18 = arith.constant 0 : index
    %22 = vector.load %arg8[%c0_17, %c0_18] : memref<1x320xf32, #tpu.memory_space<vmem>>, vector<1x320xf32>
    %23 = vector.broadcast %22 : vector<1x320xf32> to vector<8x320xf32>
    %24 = arith.addf %21, %23 : vector<8x320xf32>
    %25 = tpu.concatenate %18, %18, %18, %18, %18 in 1 : vector<8x64xf32>, vector<8x64xf32>, vector<8x64xf32>, vector<8x64xf32>, vector<8x64xf32> -> vector<8x320xf32>
    %26 = arith.mulf %24, %25 : vector<8x320xf32>
    %27 = arith.truncf %26 : vector<8x320xf32> to vector<8x320xbf16>
    %c0_19 = arith.constant 0 : index
    %c0_20 = arith.constant 0 : index
    %28 = vector.load %arg9[%c0_19, %c0_20] : memref<320x80xbf16, #tpu.memory_space<vmem>>, vector<320x80xbf16>
    %cst_21 = arith.constant dense<0.000000e+00> : vector<8x80xf32>
    %29 = tpu.matmul %27, %28, %cst_21 {dimension_numbers = #tpu.dot_dimension_numbers<[1], [0], [0], [1], [0, 0, 1, 1], [], []>} : vector<8x320xbf16>, vector<320x80xbf16>, vector<8x80xf32> -> vector<8x80xf32>
    %c0_22 = arith.constant 0 : index
    %c0_23 = arith.constant 0 : index
    %30 = vector.load %arg10[%c0_22, %c0_23] : memref<1x80xf32, #tpu.memory_space<vmem>>, vector<1x80xf32>
    %31 = vector.broadcast %30 : vector<1x80xf32> to vector<8x80xf32>
    %32 = arith.addf %29, %31 : vector<8x80xf32>
    %c0_24 = arith.constant 0 : index
    %c0_25 = arith.constant 0 : index
    %33 = vector.load %arg11[%c0_24, %c0_25] : memref<8x80xf32, #tpu.memory_space<vmem>>, vector<8x80xf32>
    tpu.vector_store %arg11[%c0_24, %c0_25], %32 {strides = array<i32>} : memref<8x80xf32, #tpu.memory_space<vmem>>, vector<8x80xf32>,
    return
  }
  func.func @transform_0(%arg0: i32) -> (i32, i32) {
    %c0_i32 = arith.constant 0 : i32
    %c0_i32_0 = arith.constant 0 : i32
    return %arg0, %c0_i32 : i32, i32
  }
  func.func @transform_1(%arg0: i32) -> (i32, i32) {
    %c0_i32 = arith.constant 0 : i32
    %c0_i32_0 = arith.constant 0 : i32
    return %arg0, %c0_i32 : i32, i32
  }
  func.func @transform_2(%arg0: i32) -> (i32, i32) {
    %c0_i32 = arith.constant 0 : i32
    %c0_i32_0 = arith.constant 0 : i32
    %c0_i32_1 = arith.constant 0 : i32
    return %c0_i32, %c0_i32_0 : i32, i32
  }
  func.func @transform_3(%arg0: i32) -> (i32, i32) {
    %c0_i32 = arith.constant 0 : i32
    %c0_i32_0 = arith.constant 0 : i32
    %c0_i32_1 = arith.constant 0 : i32
    return %c0_i32, %c0_i32_0 : i32, i32
  }
  func.func @transform_4(%arg0: i32) -> (i32, i32) {
    %c0_i32 = arith.constant 0 : i32
    %c0_i32_0 = arith.constant 0 : i32
    %c0_i32_1 = arith.constant 0 : i32
    return %c0_i32, %c0_i32_0 : i32, i32
  }
  func.func @transform_5(%arg0: i32) -> (i32, i32) {
    %c0_i32 = arith.constant 0 : i32
    %c0_i32_0 = arith.constant 0 : i32
    %c0_i32_1 = arith.constant 0 : i32
    return %c0_i32, %c0_i32_0 : i32, i32
  }
  func.func @transform_6(%arg0: i32) -> (i32, i32) {
    %c0_i32 = arith.constant 0 : i32
    %c0_i32_0 = arith.constant 0 : i32
    %c0_i32_1 = arith.constant 0 : i32
    return %c0_i32, %c0_i32_0 : i32, i32
  }
  func.func @transform_7(%arg0: i32) -> (i32, i32) {
    %c0_i32 = arith.constant 0 : i32
    %c0_i32_0 = arith.constant 0 : i32
    %c0_i32_1 = arith.constant 0 : i32
    return %c0_i32, %c0_i32_0 : i32, i32
  }
  func.func @transform_8(%arg0: i32) -> (i32, i32) {
    %c0_i32 = arith.constant 0 : i32
    %c0_i32_0 = arith.constant 0 : i32
    %c0_i32_1 = arith.constant 0 : i32
    return %c0_i32, %c0_i32_0 : i32, i32
  }
  func.func @transform_9(%arg0: i32) -> (i32, i32) {
    %c0_i32 = arith.constant 0 : i32
    %c0_i32_0 = arith.constant 0 : i32
    %c0_i32_1 = arith.constant 0 : i32
    return %c0_i32, %c0_i32_0 : i32, i32
  }
  func.func @transform_10(%arg0: i32) -> (i32, i32) {
    %c0_i32 = arith.constant 0 : i32
    %c0_i32_0 = arith.constant 0 : i32
    return %arg0, %c0_i32 : i32, i32
  }
}

</mosaic_0001>

<llo_original>
// kernel: tpu_custom_call.1
$region0: #{tpu_custom_call.1}
  #allocation0 [shape = 'u32[]', space=smem, size = 0x4, offset = 0x4, fixed_abs, tag = 'smem constant byte address 0x4 - core index']
  #allocation1 [shape = 'u32[144,128]{1,0:T(1,128)}', space=vmem, size = 0x12000, scoped, tag = 'internal scratch']
  %s0 = inlined_call_operand.vmem [shape: bf16[8,24], index: 0, kind: input, shape index: {}]
  %s1 = inlined_call_operand.vmem [shape: bf16[8,160], index: 1, kind: input, shape index: {}]
  %s2 = inlined_call_operand.vmem [shape: bf16[24,32], index: 2, kind: input, shape index: {}]
  %s3 = inlined_call_operand.vmem [shape: f32[1,32], index: 3, kind: input, shape index: {}]
  %s4 = inlined_call_operand.vmem [shape: bf16[32,64], index: 4, kind: input, shape index: {}]
  %s5 = inlined_call_operand.vmem [shape: f32[1,64], index: 5, kind: input, shape index: {}]
  %s6 = inlined_call_operand.vmem [shape: bf16[160,320], index: 6, kind: input, shape index: {}]
  %s7 = inlined_call_operand.vmem [shape: f32[1,320], index: 7, kind: input, shape index: {}]
  %s8 = inlined_call_operand.vmem [shape: bf16[320,80], index: 8, kind: input, shape index: {}]
  %s9 = inlined_call_operand.vmem [shape: f32[1,80], index: 9, kind: input, shape index: {}]
  %s10 = inlined_call_operand.hbm [shape: f32[8,80], index: 10, kind: output, shape index: {}]
  %s11 = sld [smem:[#allocation0]]
  $region50: #{tpu_custom_call.1} parent=0
    _
  %s13 = ssub.s32 1, %s11
  %s14 = scalar_select 0, %s13, %s11
  $region1: #{tpu_custom_call.1} parent=0
    #allocation2 [shape = 'u8[4096]{0}', space=vmem, size = 0x1000, scoped, tag = 'output window, operand 0, single buffered']
    #allocation3 [shape = 's32[1]{0}', space=sflag, size = 0x4, scoped, tag = 'scoped memory for tpu_custom_call.1']
    %15 = vsyncpa [#allocation3], 0
    // Predicated region
    $region2: #{tpu_custom_call.1} parent=1 // pred_check
      _
    $region3: #{tpu_custom_call.1} parent=1 // pred_check_branch
      %17 = sbr.rel (0) target = $region5
    $region4: #{tpu_custom_call.1} parent=1 // pred_region
      _
    $region5: #{tpu_custom_call.1} parent=1 // pred_fallthru
      _
    // Predicated region
    $region6: #{tpu_custom_call.1} parent=1 // pred_check
      _
    $region7: #{tpu_custom_call.1} parent=1 // pred_check_branch
      %19 = sbr.rel (0) target = $region9
    $region8: #{tpu_custom_call.1} parent=1 // pred_region
      _
    $region9: #{tpu_custom_call.1} parent=1 // pred_fallthru
      _
    // Predicated region
    $region10: #{tpu_custom_call.1} parent=1 // pred_check
      _
    $region11: #{tpu_custom_call.1} parent=1 // pred_check_branch
      %21 = sbr.rel (0) target = $region13
    $region12: #{tpu_custom_call.1} parent=1 // pred_region
      _
    $region13: #{tpu_custom_call.1} parent=1 // pred_fallthru
      _
    // Predicated region
    $region14: #{tpu_custom_call.1} parent=1 // pred_check
      _
    $region15: #{tpu_custom_call.1} parent=1 // pred_check_branch
      %23 = sbr.rel (0) target = $region17
    $region16: #{tpu_custom_call.1} parent=1 // pred_region
      _
    $region17: #{tpu_custom_call.1} parent=1 // pred_fallthru
      _
    // Predicated region
    $region18: #{tpu_custom_call.1} parent=1 // pred_check
      _
    $region19: #{tpu_custom_call.1} parent=1 // pred_check_branch
      %25 = sbr.rel (0) target = $region21
    $region20: #{tpu_custom_call.1} parent=1 // pred_region
      _
    $region21: #{tpu_custom_call.1} parent=1 // pred_fallthru
      _
    // Predicated region
    $region22: #{tpu_custom_call.1} parent=1 // pred_check
      _
    $region23: #{tpu_custom_call.1} parent=1 // pred_check_branch
      %27 = sbr.rel (0) target = $region25
    $region24: #{tpu_custom_call.1} parent=1 // pred_region
      _
    $region25: #{tpu_custom_call.1} parent=1 // pred_fallthru
      _
    // Predicated region
    $region26: #{tpu_custom_call.1} parent=1 // pred_check
      _
    $region27: #{tpu_custom_call.1} parent=1 // pred_check_branch
      %29 = sbr.rel (0) target = $region29
    $region28: #{tpu_custom_call.1} parent=1 // pred_region
      _
    $region29: #{tpu_custom_call.1} parent=1 // pred_fallthru
      _
    // Predicated region
    $region30: #{tpu_custom_call.1} parent=1 // pred_check
      _
    $region31: #{tpu_custom_call.1} parent=1 // pred_check_branch
      %31 = sbr.rel (0) target = $region33
    $region32: #{tpu_custom_call.1} parent=1 // pred_region
      _
    $region33: #{tpu_custom_call.1} parent=1 // pred_fallthru
      _
    // Predicated region
    $region34: #{tpu_custom_call.1} parent=1 // pred_check
      _
    $region35: #{tpu_custom_call.1} parent=1 // pred_check_branch
      %33 = sbr.rel (0) target = $region37
    $region36: #{tpu_custom_call.1} parent=1 // pred_region
      _
    $region37: #{tpu_custom_call.1} parent=1 // pred_fallthru
      _
    // Predicated region
    $region38: #{tpu_custom_call.1} parent=1 // pred_check
      _
    $region39: #{tpu_custom_call.1} parent=1 // pred_check_branch
      %35 = sbr.rel (0) target = $region41
    $region40: #{tpu_custom_call.1} parent=1 // pred_region
      _
    $region41: #{tpu_custom_call.1} parent=1 // pred_fallthru
      _
    %v37 = vld [vmem:[%s0] sm:$0xf]
    %v38 = vld [vmem:[%s2] sm:$0xf]
    %v39 = vld [vmem:[%s2 + $0x4] sm:$0xf]
    %v40 = vld [vmem:[%s2 + $0x8] sm:$0xf]
    %v41 = vld [vmem:[%s3] sm:$0x1]
    %v43 = vlaneseq
    %v44 = vshrl.u32 %v43, 7
    %v45 = vsub.s32 0, %v44
    %v46 = vrot.slane %v41, %v45
    %v51 = vunpack.c.l.b16 %v38
    %v52 = vunpack.c.l.b16 %v39
    %v53 = vunpack.c.l.b16 %v40
    %v54 = vpack.c.b16 %v52, %v51
    %v55 = vpack.c.b16 %v53, %v53
    %vm57 = vcmask 195584
    %v59 = vsel %vm57, %v37, 0
    %vm61 = vcmask 1043456
    %v63 = vsel %vm61, %v55, 0
    %65 = vmatprep.subr.bf16.mxu0 0
    %66 = vmatpush1.bf16.msra.mxu0 %v54
    %67 = vmatprep.subr.bf16.mxu0 0
    %68 = vmatpush1.bf16.msra.mxu0 %v63
    %69 = vmatprep.subr.bf16.mxu0 0
    %70 = vmatpush1.bf16.msra.mxu0 0
    %71 = vmatprep.subr.bf16.mxu0 0
    %72 = vmatpush1.bf16.msra.mxu0 0
    %73 = vmatprep.subr.bf16.mxu0 0
    %74 = vmatpush1.bf16.msra.mxu0 0
    %75 = vmatprep.subr.bf16.mxu0 0
    %76 = vmatpush1.bf16.msra.mxu0 0
    %77 = vmatprep.subr.bf16.mxu0 0
    %78 = vmatpush1.bf16.msra.mxu0 0
    %79 = vmatprep.subr.bf16.mxu0 0
    %80 = vmatpush1.bf16.msra.mxu0 0
    %81 = vmatprep.subr.bf16.mxu0 0
    %82 = vmatpush1.bf16.msra.mxu0 0
    %83 = vmatprep.subr.bf16.mxu0 0
    %84 = vmatpush1.bf16.msra.mxu0 0
    %85 = vmatprep.subr.bf16.mxu0 0
    %86 = vmatpush1.bf16.msra.mxu0 0
    %87 = vmatprep.subr.bf16.mxu0 0
    %88 = vmatpush1.bf16.msra.mxu0 0
    %89 = vmatprep.subr.bf16.mxu0 0
    %90 = vmatpush1.bf16.msra.mxu0 0
    %91 = vmatprep.subr.bf16.mxu0 0
    %92 = vmatpush1.bf16.msra.mxu0 0
    %93 = vmatprep.subr.bf16.mxu0 0
    %94 = vmatpush1.bf16.msra.mxu0 0
    %95 = vmatprep.subr.bf16.mxu0 0
    %96 = vmatpush1.bf16.msra.mxu0 0
    %97 = vmatprep.mubr.bf16.mxu0 0
    %98 = vmatmul.mubr.bf16.gmra.mrb[0].mxu0 %v59
    %v99 = vpop.f32.mrb[0].mxu0
    %v100 = vadd.f32 %v46, %v99
    %v101 = vpop.f32.mrb[0].mxu0
    %v102 = vpop.f32.mrb[0].mxu0
    %v103 = vpop.f32.mrb[0].mxu0
    %104 = vdwg.mxu0
    %v105 = vsub.f32 0.0, %v100
    %v106 = vmul.f32 %v105, 1.442695
    %v107 = vpow.pop %v106
    %v108 = vadd.f32 %v107, 1.0
    %v109 = vrcp.pop %v108
    %v110 = vmul.f32 %v100, %v109
    %v111 = vpack.c.bf16 %v110, %v110
    %v112 = vld [vmem:[%s4] sm:$0xf]
    %v113 = vld [vmem:[%s4 + $0x4] sm:$0xf]
    %v114 = vld [vmem:[%s4 + $0x8] sm:$0xf]
    %v115 = vld [vmem:[%s4 + $0xc] sm:$0xf]
    %v116 = vld [vmem:[%s5] sm:$0x1]
    %v118 = vlaneseq
    %v119 = vshrl.u32 %v118, 7
    %v120 = vsub.s32 0, %v119
    %v121 = vrot.slane %v116, %v120
    %v127 = vunpack.c.l.b16 %v112
    %v128 = vunpack.c.l.b16 %v113
    %v129 = vunpack.c.l.b16 %v114
    %v130 = vunpack.c.l.b16 %v115
    %v131 = vpack.c.b16 %v128, %v127
    %v132 = vpack.c.b16 %v130, %v129
    %vm135 = vcmask 261120
    %v137 = vsel %vm135, %v111, 0
    %139 = vmatprep.subr.bf16.mxu0 0
    %140 = vmatpush1.bf16.msra.mxu0 %v131
    %141 = vmatprep.subr.bf16.mxu0 0
    %142 = vmatpush1.bf16.msra.mxu0 %v132
    %143 = vmatprep.subr.bf16.mxu0 0
    %144 = vmatpush1.bf16.msra.mxu0 0
    %145 = vmatprep.subr.bf16.mxu0 0
    %146 = vmatpush1.bf16.msra.mxu0 0
    %147 = vmatprep.subr.bf16.mxu0 0
    %148 = vmatpush1.bf16.msra.mxu0 0
    %149 = vmatprep.subr.bf16.mxu0 0
    %150 = vmatpush1.bf16.msra.mxu0 0
    %151 = vmatprep.subr.bf16.mxu0 0
    %152 = vmatpush1.bf16.msra.mxu0 0
    %153 = vmatprep.subr.bf16.mxu0 0
    %154 = vmatpush1.bf16.msra.mxu0 0
    %155 = vmatprep.subr.bf16.mxu0 0
    %156 = vmatpush1.bf16.msra.mxu0 0
    %157 = vmatprep.subr.bf16.mxu0 0
    %158 = vmatpush1.bf16.msra.mxu0 0
    %159 = vmatprep.subr.bf16.mxu0 0
    %160 = vmatpush1.bf16.msra.mxu0 0
    %161 = vmatprep.subr.bf16.mxu0 0
    %162 = vmatpush1.bf16.msra.mxu0 0
    %163 = vmatprep.subr.bf16.mxu0 0
    %164 = vmatpush1.bf16.msra.mxu0 0
    %165 = vmatprep.subr.bf16.mxu0 0
    %166 = vmatpush1.bf16.msra.mxu0 0
    %167 = vmatprep.subr.bf16.mxu0 0
    %168 = vmatpush1.bf16.msra.mxu0 0
    %169 = vmatprep.subr.bf16.mxu0 0
    %170 = vmatpush1.bf16.msra.mxu0 0
    %171 = vmatprep.mubr.bf16.mxu0 0
    %172 = vmatmul.mubr.bf16.gmra.mrb[0].mxu0 %v137
    %v173 = vpop.f32.mrb[0].mxu0
    %v174 = vadd.f32 %v121, %v173
    %v175 = vpop.f32.mrb[0].mxu0
    %v176 = vpop.f32.mrb[0].mxu0
    %v177 = vpop.f32.mrb[0].mxu0
    %178 = vdwg.mxu0
    %v179 = vld [vmem:[%s1] sm:$0xff]
    %v180 = vld [vmem:[%s6] sm:$0xff]
    %v181 = vld [vmem:[%s6 + $0x8] sm:$0xf]
    %v182 = vld [vmem:[%s6 + $0xc] sm:$0xff]
    %v183 = vld [vmem:[%s6 + $0x14] sm:$0xf]
    %v184 = vld [vmem:[%s6 + $0x18] sm:$0xff]
    %v185 = vld [vmem:[%s6 + $0x20] sm:$0xf]
    %v186 = vld [vmem:[%s6 + $0x24] sm:$0xff]
    %v187 = vld [vmem:[%s6 + $0x2c] sm:$0xf]
    %v188 = vld [vmem:[%s6 + $0x30] sm:$0xff]
    %v189 = vld [vmem:[%s6 + $0x38] sm:$0xf]
    %v190 = vld [vmem:[%s6 + $0x3c] sm:$0xff]
    %v191 = vld [vmem:[%s6 + $0x44] sm:$0xf]
    %v192 = vld [vmem:[%s6 + $0x48] sm:$0xff]
    %v193 = vld [vmem:[%s6 + $0x50] sm:$0xf]
    %v194 = vld [vmem:[%s6 + $0x54] sm:$0xff]
    %v195 = vld [vmem:[%s6 + $0x5c] sm:$0xf]
    %v196 = vld [vmem:[%s6 + $0x60] sm:$0xff]
    %v197 = vld [vmem:[%s6 + $0x68] sm:$0xf]
    %v198 = vld [vmem:[%s6 + $0x6c] sm:$0xff]
    %v199 = vld [vmem:[%s6 + $0x74] sm:$0xf]
    %v200 = vld [vmem:[%s6 + $0x78] sm:$0xff]
    %v201 = vld [vmem:[%s6 + $0x80] sm:$0xf]
    %v202 = vld [vmem:[%s6 + $0x84] sm:$0xff]
    %v203 = vld [vmem:[%s6 + $0x8c] sm:$0xf]
    %v204 = vld [vmem:[%s6 + $0x90] sm:$0xff]
    %v205 = vld [vmem:[%s6 + $0x98] sm:$0xf]
    %v206 = vld [vmem:[%s6 + $0x9c] sm:$0xff]
    %v207 = vld [vmem:[%s6 + $0xa4] sm:$0xf]
    %v208 = vld [vmem:[%s6 + $0xa8] sm:$0xff]
    %v209 = vld [vmem:[%s6 + $0xb0] sm:$0xf]
    %v210 = vld [vmem:[%s6 + $0xb4] sm:$0xff]
    %v211 = vld [vmem:[%s6 + $0xbc] sm:$0xf]
    %v212 = vld [vmem:[%s6 + $0xc0] sm:$0xff]
    %v213 = vld [vmem:[%s6 + $0xc8] sm:$0xf]
    %v214 = vld [vmem:[%s6 + $0xcc] sm:$0xff]
    %v215 = vld [vmem:[%s6 + $0xd4] sm:$0xf]
    %v216 = vld [vmem:[%s6 + $0xd8] sm:$0xff]
    %v217 = vld [vmem:[%s6 + $0xe0] sm:$0xf]
    %v218 = vld [vmem:[%s6 + $0xe4] sm:$0xff]
    %v219 = vld [vmem:[%s6 + $0xec] sm:$0xf]
    %v220 = vld [vmem:[%s7] sm:$0x7]
    %v222 = vlaneseq
    %v223 = vshrl.u32 %v222, 7
    %v224 = vsub.s32 0, %v223
    %v225 = vrot.slane %v220, %v224
    %v226 = vlaneseq
    %v227 = vshrl.u32 %v226, 7
    %v228 = vsub.s32 1, %v227
    %v229 = vrot.slane %v220, %v228
    %v230 = vlaneseq
    %v231 = vshrl.u32 %v230, 7
    %v232 = vsub.s32 2, %v231
    %v233 = vrot.slane %v220, %v232
    %v238 = vunpack.c.l.b16 %v179
    %v239 = vunpack.c.h.b16 %v179
    %v240 = vpack.c.b16 %v238, %v238
    %v241 = vpack.c.b16 %v239, %v239
    %v283 = vunpack.c.l.b16 %v180
    %v284 = vunpack.c.h.b16 %v180
    %v285 = vunpack.c.l.b16 %v181
    %v286 = vunpack.c.l.b16 %v182
    %v287 = vunpack.c.h.b16 %v182
    %v288 = vunpack.c.l.b16 %v183
    %v289 = vunpack.c.l.b16 %v184
    %v290 = vunpack.c.h.b16 %v184
    %v291 = vunpack.c.l.b16 %v185
    %v292 = vunpack.c.l.b16 %v186
    %v293 = vunpack.c.h.b16 %v186
    %v294 = vunpack.c.l.b16 %v187
    %v295 = vunpack.c.l.b16 %v188
    %v296 = vunpack.c.h.b16 %v188
    %v297 = vunpack.c.l.b16 %v189
    %v298 = vunpack.c.l.b16 %v190
    %v299 = vunpack.c.h.b16 %v190
    %v300 = vunpack.c.l.b16 %v191
    %v301 = vunpack.c.l.b16 %v192
    %v302 = vunpack.c.h.b16 %v192
    %v303 = vunpack.c.l.b16 %v193
    %v304 = vunpack.c.l.b16 %v194
    %v305 = vunpack.c.h.b16 %v194
    %v306 = vunpack.c.l.b16 %v195
    %v307 = vunpack.c.l.b16 %v196
    %v308 = vunpack.c.h.b16 %v196
    %v309 = vunpack.c.l.b16 %v197
    %v310 = vunpack.c.l.b16 %v198
    %v311 = vunpack.c.h.b16 %v198
    %v312 = vunpack.c.l.b16 %v199
    %v313 = vunpack.c.l.b16 %v200
    %v314 = vunpack.c.h.b16 %v200
    %v315 = vunpack.c.l.b16 %v201
    %v316 = vunpack.c.l.b16 %v202
    %v317 = vunpack.c.h.b16 %v202
    %v318 = vunpack.c.l.b16 %v203
    %v319 = vunpack.c.l.b16 %v204
    %v320 = vunpack.c.h.b16 %v204
    %v321 = vunpack.c.l.b16 %v205
    %v322 = vunpack.c.l.b16 %v206
    %v323 = vunpack.c.h.b16 %v206
    %v324 = vunpack.c.l.b16 %v207
    %v325 = vunpack.c.l.b16 %v208
    %v326 = vunpack.c.h.b16 %v208
    %v327 = vunpack.c.l.b16 %v209
    %v328 = vunpack.c.l.b16 %v210
    %v329 = vunpack.c.h.b16 %v210
    %v330 = vunpack.c.l.b16 %v211
    %v331 = vunpack.c.l.b16 %v212
    %v332 = vunpack.c.h.b16 %v212
    %v333 = vunpack.c.l.b16 %v213
    %v334 = vunpack.c.l.b16 %v214
    %v335 = vunpack.c.h.b16 %v214
    %v336 = vunpack.c.l.b16 %v215
    %v337 = vunpack.c.l.b16 %v216
    %v338 = vunpack.c.h.b16 %v216
    %v339 = vunpack.c.l.b16 %v217
    %v340 = vunpack.c.l.b16 %v218
    %v341 = vunpack.c.h.b16 %v218
    %v342 = vunpack.c.l.b16 %v219
    %v343 = vpack.c.b16 %v286, %v283
    %v344 = vpack.c.b16 %v287, %v284
    %v345 = vpack.c.b16 %v288, %v285
    %v346 = vpack.c.b16 %v292, %v289
    %v347 = vpack.c.b16 %v293, %v290
    %v348 = vpack.c.b16 %v294, %v291
    %v349 = vpack.c.b16 %v298, %v295
    %v350 = vpack.c.b16 %v299, %v296
    %v351 = vpack.c.b16 %v300, %v297
    %v352 = vpack.c.b16 %v304, %v301
    %v353 = vpack.c.b16 %v305, %v302
    %v354 = vpack.c.b16 %v306, %v303
    %v355 = vpack.c.b16 %v310, %v307
    %v356 = vpack.c.b16 %v311, %v308
    %v357 = vpack.c.b16 %v312, %v309
    %v358 = vpack.c.b16 %v316, %v313
    %v359 = vpack.c.b16 %v317, %v314
    %v360 = vpack.c.b16 %v318, %v315
    %v361 = vpack.c.b16 %v322, %v319
    %v362 = vpack.c.b16 %v323, %v320
    %v363 = vpack.c.b16 %v324, %v321
    %v364 = vpack.c.b16 %v328, %v325
    %v365 = vpack.c.b16 %v329, %v326
    %v366 = vpack.c.b16 %v330, %v327
    %v367 = vpack.c.b16 %v334, %v331
    %v368 = vpack.c.b16 %v335, %v332
    %v369 = vpack.c.b16 %v336, %v333
    %v370 = vpack.c.b16 %v340, %v337
    %v371 = vpack.c.b16 %v341, %v338
    %v372 = vpack.c.b16 %v342, %v339
    %v404 = vsel %vm135, %v241, 0
    %406 = vmatprep.subr.bf16.mxu0 %v344
    %407 = vmatpush1.bf16.msra.mxu0 %v343
    %408 = vmatprep.subr.bf16.mxu0 %v347
    %409 = vmatpush1.bf16.msra.mxu0 %v346
    %410 = vmatprep.subr.bf16.mxu0 %v350
    %411 = vmatpush1.bf16.msra.mxu0 %v349
    %412 = vmatprep.subr.bf16.mxu0 %v353
    %413 = vmatpush1.bf16.msra.mxu0 %v352
    %414 = vmatprep.subr.bf16.mxu0 %v356
    %415 = vmatpush1.bf16.msra.mxu0 %v355
    %416 = vmatprep.subr.bf16.mxu0 %v359
    %417 = vmatpush1.bf16.msra.mxu0 %v358
    %418 = vmatprep.subr.bf16.mxu0 %v362
    %419 = vmatpush1.bf16.msra.mxu0 %v361
    %420 = vmatprep.subr.bf16.mxu0 %v365
    %421 = vmatpush1.bf16.msra.mxu0 %v364
    %422 = vmatprep.subr.bf16.mxu0 %v368
    %423 = vmatpush1.bf16.msra.mxu0 %v367
    %424 = vmatprep.subr.bf16.mxu0 %v371
    %425 = vmatpush1.bf16.msra.mxu0 %v370
    %426 = vmatprep.subr.bf16.mxu0 0
    %427 = vmatpush1.bf16.msra.mxu0 0
    %428 = vmatprep.subr.bf16.mxu0 0
    %429 = vmatpush1.bf16.msra.mxu0 0
    %430 = vmatprep.subr.bf16.mxu0 0
    %431 = vmatpush1.bf16.msra.mxu0 0
    %432 = vmatprep.subr.bf16.mxu0 0
    %433 = vmatpush1.bf16.msra.mxu0 0
    %434 = vmatprep.subr.bf16.mxu0 0
    %435 = vmatpush1.bf16.msra.mxu0 0
    %436 = vmatprep.subr.bf16.mxu0 0
    %437 = vmatpush1.bf16.msra.mxu0 0
    %438 = vmatprep.mubr.bf16.mxu0 %v404
    %439 = vmatmul.mubr.bf16.gmra.mrb[0].mxu0 %v240
    %v440 = vpop.f32.mrb[0].mxu0
    %v441 = vadd.f32 %v225, %v440
    %v442 = vpop.f32.mrb[0].mxu0
    %v443 = vadd.f32 %v229, %v442
    %v444 = vpop.f32.mrb[0].mxu0
    %v445 = vpop.f32.mrb[0].mxu0
    %446 = vdwg.mxu0
    %447 = vmatprep.subr.bf16.mxu0 0
    %448 = vmatpush1.bf16.msra.mxu0 %v345
    %449 = vmatprep.subr.bf16.mxu0 0
    %450 = vmatpush1.bf16.msra.mxu0 %v348
    %451 = vmatprep.subr.bf16.mxu0 0
    %452 = vmatpush1.bf16.msra.mxu0 %v351
    %453 = vmatprep.subr.bf16.mxu0 0
    %454 = vmatpush1.bf16.msra.mxu0 %v354
    %455 = vmatprep.subr.bf16.mxu0 0
    %456 = vmatpush1.bf16.msra.mxu0 %v357
    %457 = vmatprep.subr.bf16.mxu0 0
    %458 = vmatpush1.bf16.msra.mxu0 %v360
    %459 = vmatprep.subr.bf16.mxu0 0
    %460 = vmatpush1.bf16.msra.mxu0 %v363
    %461 = vmatprep.subr.bf16.mxu0 0
    %462 = vmatpush1.bf16.msra.mxu0 %v366
    %463 = vmatprep.subr.bf16.mxu0 0
    %464 = vmatpush1.bf16.msra.mxu0 %v369
    %465 = vmatprep.subr.bf16.mxu0 0
    %466 = vmatpush1.bf16.msra.mxu0 %v372
    %467 = vmatprep.subr.bf16.mxu0 0
    %468 = vmatpush1.bf16.msra.mxu0 0
    %469 = vmatprep.subr.bf16.mxu0 0
    %470 = vmatpush1.bf16.msra.mxu0 0
    %471 = vmatprep.subr.bf16.mxu0 0
    %472 = vmatpush1.bf16.msra.mxu0 0
    %473 = vmatprep.subr.bf16.mxu0 0
    %474 = vmatpush1.bf16.msra.mxu0 0
    %475 = vmatprep.subr.bf16.mxu0 0
    %476 = vmatpush1.bf16.msra.mxu0 0
    %477 = vmatprep.subr.bf16.mxu0 0
    %478 = vmatpush1.bf16.msra.mxu0 0
    %479 = vmatprep.mubr.bf16.mxu0 %v404
    %480 = vmatmul.mubr.bf16.gmra.mrb[0].mxu0 %v240
    %v481 = vpop.f32.mrb[0].mxu0
    %v482 = vadd.f32 %v233, %v481
    %v483 = vpop.f32.mrb[0].mxu0
    %v484 = vpop.f32.mrb[0].mxu0
    %v485 = vpop.f32.mrb[0].mxu0
    %486 = vdwg.mxu0
    %488 = vrot.lane.b32.xlu0 %v174, 64
    %v489 = vpop.permute.xlu0 %488
    %vm491 = vcmask 523264
    %v492 = vsel %vm491, %v174, %v489
    %v493 = vmul.f32 %v441, %v492
    %v494 = vmul.f32 %v443, %v492
    %v495 = vmul.f32 %v482, %v174
    %v496 = vpack.c.bf16 %v493, %v493
    %v497 = vpack.c.bf16 %v494, %v494
    %v498 = vpack.c.bf16 %v495, %v495
    %v499 = vld [vmem:[%s8] sm:$0xf]
    %v500 = vld [vmem:[%s8 + $0x4] sm:$0xf]
    %v501 = vld [vmem:[%s8 + $0x8] sm:$0xf]
    %v502 = vld [vmem:[%s8 + $0xc] sm:$0xf]
    %v503 = vld [vmem:[%s8 + $0x10] sm:$0xf]
    %v504 = vld [vmem:[%s8 + $0x14] sm:$0xf]
    %v505 = vld [vmem:[%s8 + $0x18] sm:$0xf]
    %v506 = vld [vmem:[%s8 + $0x1c] sm:$0xf]
    %v507 = vld [vmem:[%s8 + $0x20] sm:$0xf]
    %v508 = vld [vmem:[%s8 + $0x24] sm:$0xf]
    %v509 = vld [vmem:[%s8 + $0x28] sm:$0xf]
    %v510 = vld [vmem:[%s8 + $0x2c] sm:$0xf]
    %v511 = vld [vmem:[%s8 + $0x30] sm:$0xf]
    %v512 = vld [vmem:[%s8 + $0x34] sm:$0xf]
    %v513 = vld [vmem:[%s8 + $0x38] sm:$0xf]
    %v514 = vld [vmem:[%s8 + $0x3c] sm:$0xf]
    %v515 = vld [vmem:[%s8 + $0x40] sm:$0xf]
    %v516 = vld [vmem:[%s8 + $0x44] sm:$0xf]
    %v517 = vld [vmem:[%s8 + $0x48] sm:$0xf]
    %v518 = vld [vmem:[%s8 + $0x4c] sm:$0xf]
    %v519 = vld [vmem:[%s8 + $0x50] sm:$0xf]
    %v520 = vld [vmem:[%s8 + $0x54] sm:$0xf]
    %v521 = vld [vmem:[%s8 + $0x58] sm:$0xf]
    %v522 = vld [vmem:[%s8 + $0x5c] sm:$0xf]
    %v523 = vld [vmem:[%s8 + $0x60] sm:$0xf]
    %v524 = vld [vmem:[%s8 + $0x64] sm:$0xf]
    %v525 = vld [vmem:[%s8 + $0x68] sm:$0xf]
    %v526 = vld [vmem:[%s8 + $0x6c] sm:$0xf]
    %v527 = vld [vmem:[%s8 + $0x70] sm:$0xf]
    %v528 = vld [vmem:[%s8 + $0x74] sm:$0xf]
    %v529 = vld [vmem:[%s8 + $0x78] sm:$0xf]
    %v530 = vld [vmem:[%s8 + $0x7c] sm:$0xf]
    %v531 = vld [vmem:[%s8 + $0x80] sm:$0xf]
    %v532 = vld [vmem:[%s8 + $0x84] sm:$0xf]
    %v533 = vld [vmem:[%s8 + $0x88] sm:$0xf]
    %v534 = vld [vmem:[%s8 + $0x8c] sm:$0xf]
    %v535 = vld [vmem:[%s8 + $0x90] sm:$0xf]
    %v536 = vld [vmem:[%s8 + $0x94] sm:$0xf]
    %v537 = vld [vmem:[%s8 + $0x98] sm:$0xf]
    %v538 = vld [vmem:[%s8 + $0x9c] sm:$0xf]
    %v539 = vld [vmem:[%s9] sm:$0x1]
    %v541 = vlaneseq
    %v542 = vshrl.u32 %v541, 7
    %v543 = vsub.s32 0, %v542
    %v544 = vrot.slane %v539, %v543
    %v586 = vunpack.c.l.b16 %v499
    %v587 = vunpack.c.l.b16 %v500
    %v588 = vunpack.c.l.b16 %v501
    %v589 = vunpack.c.l.b16 %v502
    %v590 = vunpack.c.l.b16 %v503
    %v591 = vunpack.c.l.b16 %v504
    %v592 = vunpack.c.l.b16 %v505
    %v593 = vunpack.c.l.b16 %v506
    %v594 = vunpack.c.l.b16 %v507
    %v595 = vunpack.c.l.b16 %v508
    %v596 = vunpack.c.l.b16 %v509
    %v597 = vunpack.c.l.b16 %v510
    %v598 = vunpack.c.l.b16 %v511
    %v599 = vunpack.c.l.b16 %v512
    %v600 = vunpack.c.l.b16 %v513
    %v601 = vunpack.c.l.b16 %v514
    %v602 = vunpack.c.l.b16 %v515
    %v603 = vunpack.c.l.b16 %v516
    %v604 = vunpack.c.l.b16 %v517
    %v605 = vunpack.c.l.b16 %v518
    %v606 = vunpack.c.l.b16 %v519
    %v607 = vunpack.c.l.b16 %v520
    %v608 = vunpack.c.l.b16 %v521
    %v609 = vunpack.c.l.b16 %v522
    %v610 = vunpack.c.l.b16 %v523
    %v611 = vunpack.c.l.b16 %v524
    %v612 = vunpack.c.l.b16 %v525
    %v613 = vunpack.c.l.b16 %v526
    %v614 = vunpack.c.l.b16 %v527
    %v615 = vunpack.c.l.b16 %v528
    %v616 = vunpack.c.l.b16 %v529
    %v617 = vunpack.c.l.b16 %v530
    %v618 = vunpack.c.l.b16 %v531
    %v619 = vunpack.c.l.b16 %v532
    %v620 = vunpack.c.l.b16 %v533
    %v621 = vunpack.c.l.b16 %v534
    %v622 = vunpack.c.l.b16 %v535
    %v623 = vunpack.c.l.b16 %v536
    %v624 = vunpack.c.l.b16 %v537
    %v625 = vunpack.c.l.b16 %v538
    %v626 = vpack.c.b16 %v587, %v586
    %v627 = vpack.c.b16 %v589, %v588
    %v628 = vpack.c.b16 %v591, %v590
    %v629 = vpack.c.b16 %v593, %v592
    %v630 = vpack.c.b16 %v595, %v594
    %v631 = vpack.c.b16 %v597, %v596
    %v632 = vpack.c.b16 %v599, %v598
    %v633 = vpack.c.b16 %v601, %v600
    %v634 = vpack.c.b16 %v603, %v602
    %v635 = vpack.c.b16 %v605, %v604
    %v636 = vpack.c.b16 %v607, %v606
    %v637 = vpack.c.b16 %v609, %v608
    %v638 = vpack.c.b16 %v611, %v610
    %v639 = vpack.c.b16 %v613, %v612
    %v640 = vpack.c.b16 %v615, %v614
    %v641 = vpack.c.b16 %v617, %v616
    %v642 = vpack.c.b16 %v619, %v618
    %v643 = vpack.c.b16 %v621, %v620
    %v644 = vpack.c.b16 %v623, %v622
    %v645 = vpack.c.b16 %v625, %v624
    %v667 = vsel %vm491, %v498, 0
    %669 = vmatprep.subr.bf16.mxu0 0
    %670 = vmatpush1.bf16.msra.mxu0 %v626
    %671 = vmatprep.subr.bf16.mxu0 0
    %672 = vmatpush1.bf16.msra.mxu0 %v627
    %673 = vmatprep.subr.bf16.mxu0 0
    %674 = vmatpush1.bf16.msra.mxu0 %v628
    %675 = vmatprep.subr.bf16.mxu0 0
    %676 = vmatpush1.bf16.msra.mxu0 %v629
    %677 = vmatprep.subr.bf16.mxu0 0
    %678 = vmatpush1.bf16.msra.mxu0 %v630
    %679 = vmatprep.subr.bf16.mxu0 0
    %680 = vmatpush1.bf16.msra.mxu0 %v631
    %681 = vmatprep.subr.bf16.mxu0 0
    %682 = vmatpush1.bf16.msra.mxu0 %v632
    %683 = vmatprep.subr.bf16.mxu0 0
    %684 = vmatpush1.bf16.msra.mxu0 %v633
    %685 = vmatprep.subr.bf16.mxu0 0
    %686 = vmatpush1.bf16.msra.mxu0 %v634
    %687 = vmatprep.subr.bf16.mxu0 0
    %688 = vmatpush1.bf16.msra.mxu0 %v635
    %689 = vmatprep.subr.bf16.mxu0 0
    %690 = vmatpush1.bf16.msra.mxu0 %v636
    %691 = vmatprep.subr.bf16.mxu0 0
    %692 = vmatpush1.bf16.msra.mxu0 %v637
    %693 = vmatprep.subr.bf16.mxu0 0
    %694 = vmatpush1.bf16.msra.mxu0 %v638
    %695 = vmatprep.subr.bf16.mxu0 0
    %696 = vmatpush1.bf16.msra.mxu0 %v639
    %697 = vmatprep.subr.bf16.mxu0 0
    %698 = vmatpush1.bf16.msra.mxu0 %v640
    %699 = vmatprep.subr.bf16.mxu0 0
    %700 = vmatpush1.bf16.msra.mxu0 %v641
    %701 = vmatprep.mubr.bf16.mxu0 %v497
    %702 = vmatmul.mubr.bf16.gmra.mrb[0].mxu0 %v496
    %v703 = vpop.f32.mrb[0].mxu0
    %v704 = vadd.f32 %v544, %v703
    %v705 = vpop.f32.mrb[0].mxu0
    %v706 = vpop.f32.mrb[0].mxu0
    %v707 = vpop.f32.mrb[0].mxu0
    %708 = vdwg.mxu0
    %709 = vmatprep.subr.bf16.mxu0 0
    %710 = vmatpush1.bf16.msra.mxu0 %v642
    %711 = vmatprep.subr.bf16.mxu0 0
    %712 = vmatpush1.bf16.msra.mxu0 %v643
    %713 = vmatprep.subr.bf16.mxu0 0
    %714 = vmatpush1.bf16.msra.mxu0 %v644
    %715 = vmatprep.subr.bf16.mxu0 0
    %716 = vmatpush1.bf16.msra.mxu0 %v645
    %717 = vmatprep.subr.bf16.mxu0 0
    %718 = vmatpush1.bf16.msra.mxu0 0
    %719 = vmatprep.subr.bf16.mxu0 0
    %720 = vmatpush1.bf16.msra.mxu0 0
    %721 = vmatprep.subr.bf16.mxu0 0
    %722 = vmatpush1.bf16.msra.mxu0 0
    %723 = vmatprep.subr.bf16.mxu0 0
    %724 = vmatpush1.bf16.msra.mxu0 0
    %725 = vmatprep.subr.bf16.mxu0 0
    %726 = vmatpush1.bf16.msra.mxu0 0
    %727 = vmatprep.subr.bf16.mxu0 0
    %728 = vmatpush1.bf16.msra.mxu0 0
    %729 = vmatprep.subr.bf16.mxu0 0
    %730 = vmatpush1.bf16.msra.mxu0 0
    %731 = vmatprep.subr.bf16.mxu0 0
    %732 = vmatpush1.bf16.msra.mxu0 0
    %733 = vmatprep.subr.bf16.mxu0 0
    %734 = vmatpush1.bf16.msra.mxu0 0
    %735 = vmatprep.subr.bf16.mxu0 0
    %736 = vmatpush1.bf16.msra.mxu0 0
    %737 = vmatprep.subr.bf16.mxu0 0
    %738 = vmatpush1.bf16.msra.mxu0 0
    %739 = vmatprep.subr.bf16.mxu0 0
    %740 = vmatpush1.bf16.msra.mxu0 0
    %741 = vmatprep.mubr.bf16.mxu0 0
    %742 = vmatmul.mubr.bf16.gmra.mrb[0].mxu0 %v667
    %v743 = vpop.f32.mrb[0].mxu0
    %v744 = vadd.f32 %v704, %v743
    %v745 = vpop.f32.mrb[0].mxu0
    %v746 = vpop.f32.mrb[0].mxu0
    %v747 = vpop.f32.mrb[0].mxu0
    %748 = vdwg.mxu0
    %vm749 = vcmask 654336
    %750 = vst.msk [vmem:[#allocation2] sm:$0xff] %vm749, %v744
    // Predicated region
    $region42: #{tpu_custom_call.1} parent=1 // pred_check
      _
    $region43: #{tpu_custom_call.1} parent=1 // pred_check_branch
      %752 = sbr.rel (0) target = $region45
    $region44: #{tpu_custom_call.1} parent=1 // pred_region
      %s754 = ssub.s32 128, 128
      %755 = vsyncadd [#allocation3], %s754
      %s757 = sshll.u32 [#allocation2], 4
      %s758 = int_to_ptr.vmem [resolvable:$true] %s757
      %760 = dma.vmem_to_hbm [thread:$0]  %s758, 128, %s10, [#allocation3]
    $region45: #{tpu_custom_call.1} parent=1 // pred_fallthru
      _
    // Predicated region
    $region46: #{tpu_custom_call.1} parent=1 // pred_check
      _
    $region47: #{tpu_custom_call.1} parent=1 // pred_check_branch
      %762 = sbr.rel (0) target = $region49
    $region48: #{tpu_custom_call.1} parent=1 // pred_region
      %763 = dma.done [#allocation3], 128
    $region49: #{tpu_custom_call.1} parent=1 // pred_fallthru
      _
    %764 = vsyncpa [#allocation3], 1

</llo_original>
